<compile_context>
chip_gen: v5e
topology: v5e:2x2
jax: 0.10.0
libtpu: 0.0.40
codegen_flags: <defaults>
</compile_context>

<pallas_src>
import jax
import jax.numpy as jnp
import numpy as np
from jax.experimental import pallas as pl
from jax.experimental.pallas import tpu as pltpu

_LN_EPS = 1e-5                      # PyTorch nn.LayerNorm default
_MIN_VMEM = 8 * 1024 * 1024
_MAX_VMEM = 64 * 1024 * 1024        # v7x physical VMEM ceiling


def _vmem_limit(need_bytes):
    """Explicit scoped-VMEM budget: 2x estimated footprint, clamped to v7x."""
    return int(min(max(2 * need_bytes, _MIN_VMEM), _MAX_VMEM))


def _pick_tile_m(m):
    """M tiling: full-M for small M; >=2 steps for 129..256 rows (so the
    'parallel' axis can use both v7x TensorCores); fat 256/512-row tiles for
    large M (fewer grid steps / pipeline fills, VMEM-budget checked)."""
    if m <= 128:
        return m
    if m <= 256:
        return ((m + 1) // 2 + 7) // 8 * 8        # 2 steps, multiple of 8
    if m <= 1024:
        return 256
    return 512


# ----------------------------------------------------------------------------
# Kernel bodies
# ----------------------------------------------------------------------------
def _hidden_kernel(x_ref, w_ref, b_ref, o_ref):
    h = jnp.dot(x_ref[...], w_ref[...], preferred_element_type=jnp.float32)
    o_ref[...] = jnp.maximum(h + b_ref[...], 0.0).astype(o_ref.dtype)


def _hidden_ln_kernel(x_ref, w_ref, b_ref, g_ref, bb_ref, o_ref):
    h = jnp.dot(x_ref[...], w_ref[...], preferred_element_type=jnp.float32)
    h = h + b_ref[...]
    mu = jnp.mean(h, axis=-1, keepdims=True)
    var = jnp.mean((h - mu) ** 2, axis=-1, keepdims=True)
    h = (h - mu) * jax.lax.rsqrt(var + _LN_EPS)
    h = h * g_ref[...] + bb_ref[...]
    o_ref[...] = jnp.maximum(h, 0.0).astype(o_ref.dtype)


def _fused_kernel(x_ref, w_ref, b_ref, wc_ref, bc_ref, out_ref, hid_ref, h_scr):
    # Last hidden layer (no LayerNorm) fused with the classifier.
    # The hidden block is N-invariant: compute it only at j == 0, stash it in
    # VMEM scratch, and reuse the scratch for every classifier N tile.
    @pl.when(pl.program_id(1) == 0)
    def _():
        h = jnp.dot(x_ref[...], w_ref[...], preferred_element_type=jnp.float32)
        h = jnp.maximum(h + b_ref[...], 0.0).astype(h_scr.dtype)
        h_scr[...] = h
        hid_ref[...] = h.astype(hid_ref.dtype)

    out = jnp.dot(h_scr[...], wc_ref[...], preferred_element_type=jnp.float32)
    out_ref[...] = (out + bc_ref[...]).astype(out_ref.dtype)


def _fused_ln_kernel(x_ref, w_ref, b_ref, g_ref, bb_ref, wc_ref, bc_ref,
                     out_ref, hid_ref, h_scr):
    # Last hidden layer (with LayerNorm, stats in f32) fused with classifier.
    @pl.when(pl.program_id(1) == 0)
    def _():
        h = jnp.dot(x_ref[...], w_ref[...], preferred_element_type=jnp.float32)
        h = h + b_ref[...]
        mu = jnp.mean(h, axis=-1, keepdims=True)
        var = jnp.mean((h - mu) ** 2, axis=-1, keepdims=True)
        h = (h - mu) * jax.lax.rsqrt(var + _LN_EPS)
        h = jnp.maximum(h * g_ref[...] + bb_ref[...], 0.0).astype(h_scr.dtype)
        h_scr[...] = h
        hid_ref[...] = h.astype(hid_ref.dtype)

    out = jnp.dot(h_scr[...], wc_ref[...], preferred_element_type=jnp.float32)
    out_ref[...] = (out + bc_ref[...]).astype(out_ref.dtype)


# ----------------------------------------------------------------------------
# pallas_call wrappers
# ----------------------------------------------------------------------------
def hidden_layer(x, w, b, gamma=None, beta=None):
    """relu((ln?)(x @ w + b)).  x:(M,K) bf16, w:(K,N) bf16, b:(1,N) f32 -> (M,N) bf16."""
    m, k = x.shape
    n = w.shape[1]
    tile_m = _pick_tile_m(m)
    grid = (pl.cdiv(m, tile_m),)
    use_ln = gamma is not None

    in_specs = [
        pl.BlockSpec((tile_m, k), lambda i: (i, 0)),
        pl.BlockSpec((k, n), lambda i: (0, 0)),       # invariant weight block
        pl.BlockSpec((1, n), lambda i: (0, 0)),
    ]
    args = [x, w, b]
    if use_ln:
        in_specs += [pl.BlockSpec((1, n), lambda i: (0, 0)),
                     pl.BlockSpec((1, n), lambda i: (0, 0))]
        args += [gamma, beta]
        kernel = _hidden_ln_kernel
    else:
        kernel = _hidden_kernel

    need = (2 * tile_m * k * 2 + 2 * k * n * 2
            + (3 if use_ln else 1) * 2 * n * 4 + 2 * tile_m * n * 2)
    cost = pl.CostEstimate(
        flops=2 * m * k * n,
        transcendentals=m if use_ln else 0,
        bytes_accessed=m * k * 2 + k * n * 2
                       + (3 if use_ln else 1) * n * 4 + m * n * 2)

    return pl.pallas_call(
        kernel,
        out_shape=jax.ShapeDtypeStruct((m, n), jnp.bfloat16),
        grid_spec=pltpu.PrefetchScalarGridSpec(
            num_scalar_prefetch=0, grid=grid,
            in_specs=in_specs,
            out_specs=pl.BlockSpec((tile_m, n), lambda i: (i, 0))),
        compiler_params=pltpu.CompilerParams(
            dimension_semantics=("parallel",),
            vmem_limit_bytes=_vmem_limit(need)),
        cost_estimate=cost,
    )(*args)


def fused_hidden_classifier(x, w, b, wc, bc, gamma=None, beta=None, *,
                            tn_max=512, out_dtype=jnp.float32):
    """Last hidden layer + classifier, fused in one launch.

    x:(M,K) bf16, w:(K,H) bf16, b:(1,H) f32, wc:(H,T) bf16, bc:(1,T) f32
    -> (out (M,T) out_dtype, hidden (M,H) bf16)
    """
    m, k = x.shape
    hdim = w.shape[1]
    tag = wc.shape[1]
    tile_m = _pick_tile_m(m)
    use_ln = gamma is not None
    # Lane-dense N tiling of the streamed classifier weight whenever tag is
    # large; tn is a multiple of 128 and pl.cdiv handles a ragged last tile.
    tn = tn_max if tag > tn_max else tag
    grid = (pl.cdiv(m, tile_m), pl.cdiv(tag, tn))

    in_specs = [
        pl.BlockSpec((tile_m, k), lambda i, j: (i, 0)),
        # TODO(synk): for very large K*H on v7x (64 MiB VMEM) this invariant
        # weight block should be single-buffered / K-tiled with an f32
        # accumulator; not needed at the hidden sizes exercised here.
        pl.BlockSpec((k, hdim), lambda i, j: (0, 0)),
        pl.BlockSpec((1, hdim), lambda i, j: (0, 0)),
    ]
    args = [x, w, b]
    if use_ln:
        in_specs += [pl.BlockSpec((1, hdim), lambda i, j: (0, 0)),
                     pl.BlockSpec((1, hdim), lambda i, j: (0, 0))]
        args += [gamma, beta]
        kernel = _fused_ln_kernel
    else:
        kernel = _fused_kernel
    in_specs += [
        pl.BlockSpec((hdim, tn), lambda i, j: (0, j)),   # streamed classifier W
        pl.BlockSpec((1, tn), lambda i, j: (0, j)),
    ]
    args += [wc, bc]

    out_shapes = (jax.ShapeDtypeStruct((m, tag), out_dtype),
                  jax.ShapeDtypeStruct((m, hdim), jnp.bfloat16))
    out_specs = (pl.BlockSpec((tile_m, tn), lambda i, j: (i, j)),
                 pl.BlockSpec((tile_m, hdim), lambda i, j: (i, 0)))

    ob = np.dtype(out_dtype).itemsize
    need = (2 * tile_m * k * 2 + 2 * k * hdim * 2
            + (3 if use_ln else 1) * 2 * hdim * 4
            + 2 * hdim * tn * 2 + 2 * tn * 4
            + 2 * tile_m * tn * ob
            + 2 * tile_m * hdim * 2
            + tile_m * hdim * 2)                       # hidden scratch
    cost = pl.CostEstimate(
        flops=2 * m * k * hdim + 2 * m * hdim * tag,
        transcendentals=m if use_ln else 0,
        bytes_accessed=m * k * 2 + k * hdim * 2
                       + (3 if use_ln else 1) * hdim * 4
                       + hdim * tag * 2 + tag * 4
                       + m * tag * ob + m * hdim * 2)

    return pl.pallas_call(
        kernel,
        out_shape=out_shapes,
        grid_spec=pltpu.PrefetchScalarGridSpec(
            num_scalar_prefetch=0, grid=grid,
            in_specs=in_specs, out_specs=out_specs,
            scratch_shapes=[pltpu.VMEM((tile_m, hdim), jnp.bfloat16)]),
        compiler_params=pltpu.CompilerParams(
            # NOTE: the j axis must stay "arbitrary" — the hidden output block
            # and the scratch are written only at j == 0 and reused across j.
            dimension_semantics=("parallel", "arbitrary"),
            vmem_limit_bytes=_vmem_limit(need)),
        cost_estimate=cost,
    )(*args)


# ----------------------------------------------------------------------------
# Module wrapper (parameter setup + reshapes in plain JAX)
# ----------------------------------------------------------------------------
class MultiNonLinearClassifier:
    """JAX/Pallas port of the PyTorch MultiNonLinearClassifier forward pass."""

    def __init__(self, hidden_size, tag_size, layers_num=1, hidden_dim=None,
                 dropout_rate=0.1, with_init=False, use_norm=False,
                 return_hidden_size=False, key=None):
        # TODO(synk): dropout is treated as identity (eval-mode forward);
        # training-time stochastic masking is not implemented.
        del dropout_rate, with_init  # with_init only changes initialization
        if key is None:
            key = jax.random.PRNGKey(0)
        self.hidden_size = hidden_size
        self.tag_size = tag_size
        self.layers_num = layers_num
        self.use_norm = use_norm
        self.return_hidden_size = return_hidden_size
        if hidden_dim is None:
            hidden_dim = hidden_size // 2
        self.hidden_dim = hidden_dim

        input_dims = [hidden_size] + [hidden_dim] * (layers_num - 1)
        output_dims = [hidden_dim] * layers_num

        keys = jax.random.split(key, 2 * layers_num + 2)
        self.ws, self.bs, self.gammas, self.betas = [], [], [], []
        for i in range(layers_num):
            w = 0.02 * jax.random.normal(
                keys[2 * i], (input_dims[i], output_dims[i]), jnp.float32)
            self.ws.append(w.astype(jnp.bfloat16))       # bf16 MXU operands
            self.bs.append(0.02 * jax.random.normal(
                keys[2 * i + 1], (1, output_dims[i]), jnp.float32))
            if use_norm:
                self.gammas.append(jnp.ones((1, output_dims[i]), jnp.float32))
                self.betas.append(jnp.zeros((1, output_dims[i]), jnp.float32))
        wc = 0.02 * jax.random.normal(
            keys[-2], (output_dims[-1], tag_size), jnp.float32)
        self.wc = wc.astype(jnp.bfloat16)
        self.bc = 0.02 * jax.random.normal(
            keys[-1], (1, tag_size), jnp.float32)

    def __call__(self, x):
        lead = x.shape[:-1]
        out_dtype = x.dtype
        h = x.reshape(-1, self.hidden_size).astype(jnp.bfloat16)
        # leading hidden layers (fused Linear + LN? + ReLU each, bf16 acts)
        for i in range(self.layers_num - 1):
            g = self.gammas[i] if self.use_norm else None
            bt = self.betas[i] if self.use_norm else None
            h = hidden_layer(h, self.ws[i], self.bs[i], g, bt)
        # last hidden layer fused with the classifier
        i = self.layers_num - 1
        g = self.gammas[i] if self.use_norm else None
        bt = self.betas[i] if self.use_norm else None
        out, hid = fused_hidden_classifier(h, self.ws[i], self.bs[i],
                                           self.wc, self.bc, g, bt,
                                           out_dtype=out_dtype)
        out = out.reshape(*lead, self.tag_size)
        if self.return_hidden_size:
            return out, hid.astype(out_dtype).reshape(*lead, self.hidden_dim)
        return out

    # pure-jnp reference (mirrors the bf16 operand / f32 accumulation path)
    def reference(self, x):
        lead = x.shape[:-1]
        h = x.reshape(-1, self.hidden_size).astype(jnp.bfloat16)
        for i in range(self.layers_num):
            z = jnp.dot(h, self.ws[i],
                        preferred_element_type=jnp.float32) + self.bs[i]
            if self.use_norm:
                mu = jnp.mean(z, axis=-1, keepdims=True)
                var = jnp.mean((z - mu) ** 2, axis=-1, keepdims=True)
                z = (z - mu) * jax.lax.rsqrt(var + _LN_EPS)
                z = z * self.gammas[i] + self.betas[i]
            h = jnp.maximum(z, 0.0).astype(jnp.bfloat16)
        out = jnp.dot(h, self.wc, preferred_element_type=jnp.float32) + self.bc
        out = out.astype(x.dtype).reshape(*lead, self.tag_size)
        if self.return_hidden_size:
            return out, h.astype(x.dtype).reshape(*lead, self.hidden_dim)
        return out


if __name__ == "__main__":
    # Small, lane-friendly shapes: hidden_size=256 -> hidden_dim=128, tag_size=128.
    hidden_size = 256
    tag_size = 128
    batch, seq = 2, 8

    key = jax.random.PRNGKey(0)
    kx, kp = jax.random.split(key)
    x = jax.random.normal(kx, (batch, seq, hidden_size), jnp.float32)

    ok = True
    configs = [
        dict(layers_num=1, use_norm=False, return_hidden_size=False),
        dict(layers_num=2, use_norm=True, return_hidden_size=True),
    ]
    for cfg in configs:
        model = MultiNonLinearClassifier(hidden_size, tag_size, key=kp, **cfg)
        out = model(x)
        out = jax.block_until_ready(out)
        ref = model.reference(x)
        if cfg["return_hidden_size"]:
            o, h = out
            ro, rh = ref
            assert o.shape == (batch, seq, tag_size)
            assert h.shape == (batch, seq, hidden_size // 2)
            ok &= bool(np.allclose(np.asarray(o), np.asarray(ro),
                                   rtol=1e-2, atol=1e-2))
            ok &= bool(np.allclose(np.asarray(h), np.asarray(rh),
                                   rtol=1e-2, atol=1e-2))
        else:
            assert out.shape == (batch, seq, tag_size)
            ok &= bool(np.allclose(np.asarray(out), np.asarray(ref),
                                   rtol=1e-2, atol=1e-2))

    if ok:
        print("KERNEL_OK")
    else:
        print("KERNEL_MISMATCH")
</pallas_src>

<mosaic_0001>
module attributes {stable_mosaic.version = 11 : i64} {
  func.func @_fused_kernel(%arg0: i32, %arg1: i32, %arg2: memref<16x256xbf16, #tpu.memory_space<vmem>>, %arg3: memref<256x128xbf16, #tpu.memory_space<vmem>>, %arg4: memref<1x128xf32, #tpu.memory_space<vmem>>, %arg5: memref<128x128xbf16, #tpu.memory_space<vmem>>, %arg6: memref<1x128xf32, #tpu.memory_space<vmem>>, %arg7: memref<16x128xf32, #tpu.memory_space<vmem>>, %arg8: memref<16x128xbf16, #tpu.memory_space<vmem>>, %arg9: memref<16x128xbf16, #tpu.memory_space<vmem>>) attributes {dimension_semantics = [#tpu.dimension_semantics<parallel>, #tpu.dimension_semantics<arbitrary>], iteration_bounds = array<i64: 1, 1>, scalar_prefetch = 0 : i64, scratch_operands = 1 : i64, tpu.core_type = #tpu.core_type<tc>, window_params = [{transform_indices = @transform_0, window_bounds = array<i64: 16, 256>}, {pipeline_mode = #tpu.pipeline_mode<synchronous>, transform_indices = @transform_1, window_bounds = array<i64: 256, 128>}, {pipeline_mode = #tpu.pipeline_mode<synchronous>, transform_indices = @transform_2, window_bounds = array<i64: 1, 128>}, {transform_indices = @transform_3, window_bounds = array<i64: 128, 128>}, {transform_indices = @transform_4, window_bounds = array<i64: 1, 128>}, {transform_indices = @transform_5, window_bounds = array<i64: 16, 128>}, {transform_indices = @transform_6, window_bounds = array<i64: 16, 128>}]} {
    %c0_i32 = arith.constant 0 : i32
    %0 = arith.cmpi eq, %arg1, %c0_i32 : i32
    %1 = arith.extui %0 : i1 to i32
    %c0_i32_0 = arith.constant 0 : i32
    %2 = arith.cmpi ne, %1, %c0_i32_0 : i32
    scf.if %2 {
      %c0_8 = arith.constant 0 : index
      %c0_9 = arith.constant 0 : index
      %10 = vector.load %arg2[%c0_8, %c0_9] : memref<16x256xbf16, #tpu.memory_space<vmem>>, vector<16x256xbf16>
      %c0_10 = arith.constant 0 : index
      %c0_11 = arith.constant 0 : index
      %11 = vector.load %arg3[%c0_10, %c0_11] : memref<256x128xbf16, #tpu.memory_space<vmem>>, vector<256x128xbf16>
      %cst_12 = arith.constant dense<0.000000e+00> : vector<16x128xf32>
      %12 = tpu.matmul %10, %11, %cst_12 {dimension_numbers = #tpu.dot_dimension_numbers<[1], [0], [0], [1], [0, 0, 1, 1], [], []>} : vector<16x256xbf16>, vector<256x128xbf16>, vector<16x128xf32> -> vector<16x128xf32>
      %c0_13 = arith.constant 0 : index
      %c0_14 = arith.constant 0 : index
      %13 = vector.load %arg4[%c0_13, %c0_14] : memref<1x128xf32, #tpu.memory_space<vmem>>, vector<1x128xf32>
      %14 = vector.broadcast %13 : vector<1x128xf32> to vector<16x128xf32>
      %15 = arith.addf %12, %14 : vector<16x128xf32>
      %cst_15 = arith.constant 0.000000e+00 : f32
      %16 = vector.broadcast %cst_15 : f32 to vector<16x128xf32>
      %17 = arith.maximumf %15, %16 : vector<16x128xf32>
      %18 = arith.truncf %17 : vector<16x128xf32> to vector<16x128xbf16>
      %c0_16 = arith.constant 0 : index
      %c0_17 = arith.constant 0 : index
      %19 = vector.load %arg9[%c0_16, %c0_17] : memref<16x128xbf16, #tpu.memory_space<vmem>>, vector<16x128xbf16>
      tpu.vector_store %arg9[%c0_16, %c0_17], %18 {strides = array<i32>} : memref<16x128xbf16, #tpu.memory_space<vmem>>, vector<16x128xbf16>,
      %c0_18 = arith.constant 0 : index
      %c0_19 = arith.constant 0 : index
      %20 = vector.load %arg8[%c0_18, %c0_19] : memref<16x128xbf16, #tpu.memory_space<vmem>>, vector<16x128xbf16>
      tpu.vector_store %arg8[%c0_18, %c0_19], %18 {strides = array<i32>} : memref<16x128xbf16, #tpu.memory_space<vmem>>, vector<16x128xbf16>,
    } else {
    }
    %c0 = arith.constant 0 : index
    %c0_1 = arith.constant 0 : index
    %3 = vector.load %arg9[%c0, %c0_1] : memref<16x128xbf16, #tpu.memory_space<vmem>>, vector<16x128xbf16>
    %c0_2 = arith.constant 0 : index
    %c0_3 = arith.constant 0 : index
    %4 = vector.load %arg5[%c0_2, %c0_3] : memref<128x128xbf16, #tpu.memory_space<vmem>>, vector<128x128xbf16>
    %cst = arith.constant dense<0.000000e+00> : vector<16x128xf32>
    %5 = tpu.matmul %3, %4, %cst {dimension_numbers = #tpu.dot_dimension_numbers<[1], [0], [0], [1], [0, 0, 1, 1], [], []>} : vector<16x128xbf16>, vector<128x128xbf16>, vector<16x128xf32> -> vector<16x128xf32>
    %c0_4 = arith.constant 0 : index
    %c0_5 = arith.constant 0 : index
    %6 = vector.load %arg6[%c0_4, %c0_5] : memref<1x128xf32, #tpu.memory_space<vmem>>, vector<1x128xf32>
    %7 = vector.broadcast %6 : vector<1x128xf32> to vector<16x128xf32>
    %8 = arith.addf %5, %7 : vector<16x128xf32>
    %c0_6 = arith.constant 0 : index
    %c0_7 = arith.constant 0 : index
    %9 = vector.load %arg7[%c0_6, %c0_7] : memref<16x128xf32, #tpu.memory_space<vmem>>, vector<16x128xf32>
    tpu.vector_store %arg7[%c0_6, %c0_7], %8 {strides = array<i32>} : memref<16x128xf32, #tpu.memory_space<vmem>>, vector<16x128xf32>,
    return
  }
  func.func @transform_0(%arg0: i32, %arg1: i32) -> (i32, i32) {
    %c0_i32 = arith.constant 0 : i32
    %c0_i32_0 = arith.constant 0 : i32
    return %arg0, %c0_i32 : i32, i32
  }
  func.func @transform_1(%arg0: i32, %arg1: i32) -> (i32, i32) {
    %c0_i32 = arith.constant 0 : i32
    %c0_i32_0 = arith.constant 0 : i32
    %c0_i32_1 = arith.constant 0 : i32
    return %c0_i32, %c0_i32_0 : i32, i32
  }
  func.func @transform_2(%arg0: i32, %arg1: i32) -> (i32, i32) {
    %c0_i32 = arith.constant 0 : i32
    %c0_i32_0 = arith.constant 0 : i32
    %c0_i32_1 = arith.constant 0 : i32
    return %c0_i32, %c0_i32_0 : i32, i32
  }
  func.func @transform_3(%arg0: i32, %arg1: i32) -> (i32, i32) {
    %c0_i32 = arith.constant 0 : i32
    %c0_i32_0 = arith.constant 0 : i32
    return %c0_i32, %arg1 : i32, i32
  }
  func.func @transform_4(%arg0: i32, %arg1: i32) -> (i32, i32) {
    %c0_i32 = arith.constant 0 : i32
    %c0_i32_0 = arith.constant 0 : i32
    return %c0_i32, %arg1 : i32, i32
  }
  func.func @transform_5(%arg0: i32, %arg1: i32) -> (i32, i32) {
    %c0_i32 = arith.constant 0 : i32
    return %arg0, %arg1 : i32, i32
  }
  func.func @transform_6(%arg0: i32, %arg1: i32) -> (i32, i32) {
    %c0_i32 = arith.constant 0 : i32
    %c0_i32_0 = arith.constant 0 : i32
    return %arg0, %c0_i32 : i32, i32
  }
}

</mosaic_0001>

<llo_original>
// kernel: tpu_custom_call.1
$region0: #{tpu_custom_call.1}
  #allocation0 [shape = 'u32[]', space=smem, size = 0x4, offset = 0x4, fixed_abs, tag = 'smem constant byte address 0x4 - core index']
  #allocation1 [shape = 'u32[72,128]{1,0:T(1,128)}', space=vmem, size = 0x9000, scoped, tag = 'internal scratch']
  #allocation2 [shape = 'bf16[16,128]{1,0:T(8,128)(2,1)}', space=vmem, size = 0x1000, scoped, tag = 'scratch operand']
  %s0 = inlined_call_operand.hbm [shape: bf16[16,256], index: 0, kind: input, shape index: {}]
  %s1 = inlined_call_operand.hbm [shape: bf16[256,128], index: 1, kind: input, shape index: {}]
  %s2 = inlined_call_operand.vmem [shape: f32[1,128], index: 2, kind: input, shape index: {}]
  %s3 = inlined_call_operand.hbm [shape: bf16[128,128], index: 3, kind: input, shape index: {}]
  %s4 = inlined_call_operand.vmem [shape: f32[1,128], index: 4, kind: input, shape index: {}]
  %s5 = inlined_call_operand.hbm [shape: f32[16,128], index: 5, kind: output, shape index: {0}]
  %s6 = inlined_call_operand.hbm [shape: bf16[16,128], index: 6, kind: output, shape index: {1}]
  %7 = xla_tuple %s5, %s6
  %s8 = sld [smem:[#allocation0]]
  $region54: #{tpu_custom_call.1} parent=0
    _
  %s10 = ssub.s32 1, %s8
  %s11 = scalar_select 0, %s10, %s8
  $region1: #{tpu_custom_call.1} parent=0
    #allocation3 [shape = 'u8[8192]{0}', space=vmem, size = 0x2000, scoped, tag = 'input window, operand 0, single buffered']
    #allocation4 [shape = 's32[1]{0}', space=sflag, size = 0x4, scoped, tag = 'scoped memory for tpu_custom_call.1']
    #allocation5 [shape = 's32[1]{0}', space=sflag, size = 0x4, scoped, tag = 'scoped memory for tpu_custom_call.1']
    #allocation6 [shape = 'u8[65536]{0}', space=vmem, size = 0x10000, scoped, tag = 'input window, operand 1, single buffered']
    #allocation7 [shape = 's32[1]{0}', space=sflag, size = 0x4, scoped, tag = 'scoped memory for tpu_custom_call.1']
    #allocation8 [shape = 'u8[32768]{0}', space=vmem, size = 0x8000, scoped, tag = 'input window, operand 3, single buffered']
    #allocation9 [shape = 'u8[8192]{0}', space=vmem, size = 0x2000, scoped, tag = 'output window, operand 0, single buffered']
    #allocation10 [shape = 'u8[4096]{0}', space=vmem, size = 0x1000, scoped, tag = 'output window, operand 1, single buffered']
    #allocation11 [shape = 's32[1]{0}', space=sflag, size = 0x4, scoped, tag = 'scoped memory for tpu_custom_call.1']
    %12 = vsyncpa [#allocation4], 0
    %13 = vsyncpa [#allocation7], 0
    %14 = vsyncpa [#allocation5], 0
    %15 = vsyncpa [#allocation11], 0
    // Predicated region
    $region2: #{tpu_custom_call.1} parent=1 // pred_check
      _
    $region3: #{tpu_custom_call.1} parent=1 // pred_check_branch
      %17 = sbr.rel (0) target = $region5
    $region4: #{tpu_custom_call.1} parent=1 // pred_region
      %19 = vsyncadd [#allocation4], 0
      %s20 = sshll.u32 %s0, 4
      %s21 = int_to_ptr.hbm [resolvable:$true] %s20
      %s22 = sshll.u32 [#allocation3], 4
      %s23 = int_to_ptr.vmem [resolvable:$true] %s22
      %28 = dma.hbm_to_vmem [thread:$0]  %s21, 256, %s23, [#allocation4], 128, 128, 8
    $region5: #{tpu_custom_call.1} parent=1 // pred_fallthru
      _
    // Predicated region
    $region6: #{tpu_custom_call.1} parent=1 // pred_check
      _
    $region7: #{tpu_custom_call.1} parent=1 // pred_check_branch
      %30 = sbr.rel (0) target = $region9
    $region8: #{tpu_custom_call.1} parent=1 // pred_region
      %32 = vsyncadd [#allocation7], 0
      %s33 = sshll.u32 %s1, 4
      %s34 = int_to_ptr.hbm [resolvable:$true] %s33
      %s35 = sshll.u32 [#allocation6], 4
      %s36 = int_to_ptr.vmem [resolvable:$true] %s35
      %41 = dma.hbm_to_vmem [thread:$0]  %s34, 2048, %s36, [#allocation7], 64, 64, 4
    $region9: #{tpu_custom_call.1} parent=1 // pred_fallthru
      _
    // Predicated region
    $region10: #{tpu_custom_call.1} parent=1 // pred_check
      _
    $region11: #{tpu_custom_call.1} parent=1 // pred_check_branch
      %43 = sbr.rel (0) target = $region13
    $region12: #{tpu_custom_call.1} parent=1 // pred_region
      _
    $region13: #{tpu_custom_call.1} parent=1 // pred_fallthru
      _
    // Predicated region
    $region14: #{tpu_custom_call.1} parent=1 // pred_check
      _
    $region15: #{tpu_custom_call.1} parent=1 // pred_check_branch
      %45 = sbr.rel (0) target = $region17
    $region16: #{tpu_custom_call.1} parent=1 // pred_region
      %47 = vsyncadd [#allocation7], 0
      %s48 = sshll.u32 %s3, 4
      %s49 = int_to_ptr.hbm [resolvable:$true] %s48
      %s50 = sshll.u32 [#allocation8], 4
      %s51 = int_to_ptr.vmem [resolvable:$true] %s50
      %56 = dma.hbm_to_vmem [thread:$0]  %s49, 1024, %s51, [#allocation7], 64, 64, 4
    $region17: #{tpu_custom_call.1} parent=1 // pred_fallthru
      _
    // Predicated region
    $region18: #{tpu_custom_call.1} parent=1 // pred_check
      _
    $region19: #{tpu_custom_call.1} parent=1 // pred_check_branch
      %58 = sbr.rel (0) target = $region21
    $region20: #{tpu_custom_call.1} parent=1 // pred_region
      _
    $region21: #{tpu_custom_call.1} parent=1 // pred_fallthru
      _
    // Predicated region
    $region22: #{tpu_custom_call.1} parent=1 // pred_check
      _
    $region23: #{tpu_custom_call.1} parent=1 // pred_check_branch
      %60 = sbr.rel (0) target = $region25
    $region24: #{tpu_custom_call.1} parent=1 // pred_region
      %62 = dma.done [#allocation4], 256
    $region25: #{tpu_custom_call.1} parent=1 // pred_fallthru
      _
    // Predicated region
    $region26: #{tpu_custom_call.1} parent=1 // pred_check
      _
    $region27: #{tpu_custom_call.1} parent=1 // pred_check_branch
      %64 = sbr.rel (0) target = $region29
    $region28: #{tpu_custom_call.1} parent=1 // pred_region
      %66 = dma.done [#allocation7], 2048
    $region29: #{tpu_custom_call.1} parent=1 // pred_fallthru
      _
    // Predicated region
    $region30: #{tpu_custom_call.1} parent=1 // pred_check
      _
    $region31: #{tpu_custom_call.1} parent=1 // pred_check_branch
      %68 = sbr.rel (0) target = $region33
    $region32: #{tpu_custom_call.1} parent=1 // pred_region
      %70 = dma.done [#allocation7], 1024
    $region33: #{tpu_custom_call.1} parent=1 // pred_fallthru
      _
    %p71 = scmp.eq.s32.totalorder 0, 0
    // Predicated region
    $region34: #{tpu_custom_call.1} parent=1 // pred_check
      %p72 = pneg %p71
    $region35: #{tpu_custom_call.1} parent=1 // pred_check_branch
      %74 = sbr.rel (%p72) target = $region37
    $region36: #{tpu_custom_call.1} parent=1 // pred_region
      %v75 = vld [vmem:[#allocation3] sm:$0xff]
      %v76 = vld [vmem:[#allocation3 + $0x8] sm:$0xff]
      %v77 = vld [vmem:[#allocation6] sm:$0xf]
      %v78 = vld [vmem:[#allocation6 + $0x4] sm:$0xf]
      %v79 = vld [vmem:[#allocation6 + $0x8] sm:$0xf]
      %v80 = vld [vmem:[#allocation6 + $0xc] sm:$0xf]
      %v81 = vld [vmem:[#allocation6 + $0x10] sm:$0xf]
      %v82 = vld [vmem:[#allocation6 + $0x14] sm:$0xf]
      %v83 = vld [vmem:[#allocation6 + $0x18] sm:$0xf]
      %v84 = vld [vmem:[#allocation6 + $0x1c] sm:$0xf]
      %v85 = vld [vmem:[#allocation6 + $0x20] sm:$0xf]
      %v86 = vld [vmem:[#allocation6 + $0x24] sm:$0xf]
      %v87 = vld [vmem:[#allocation6 + $0x28] sm:$0xf]
      %v88 = vld [vmem:[#allocation6 + $0x2c] sm:$0xf]
      %v89 = vld [vmem:[#allocation6 + $0x30] sm:$0xf]
      %v90 = vld [vmem:[#allocation6 + $0x34] sm:$0xf]
      %v91 = vld [vmem:[#allocation6 + $0x38] sm:$0xf]
      %v92 = vld [vmem:[#allocation6 + $0x3c] sm:$0xf]
      %v93 = vld [vmem:[#allocation6 + $0x40] sm:$0xf]
      %v94 = vld [vmem:[#allocation6 + $0x44] sm:$0xf]
      %v95 = vld [vmem:[#allocation6 + $0x48] sm:$0xf]
      %v96 = vld [vmem:[#allocation6 + $0x4c] sm:$0xf]
      %v97 = vld [vmem:[#allocation6 + $0x50] sm:$0xf]
      %v98 = vld [vmem:[#allocation6 + $0x54] sm:$0xf]
      %v99 = vld [vmem:[#allocation6 + $0x58] sm:$0xf]
      %v100 = vld [vmem:[#allocation6 + $0x5c] sm:$0xf]
      %v101 = vld [vmem:[#allocation6 + $0x60] sm:$0xf]
      %v102 = vld [vmem:[#allocation6 + $0x64] sm:$0xf]
      %v103 = vld [vmem:[#allocation6 + $0x68] sm:$0xf]
      %v104 = vld [vmem:[#allocation6 + $0x6c] sm:$0xf]
      %v105 = vld [vmem:[#allocation6 + $0x70] sm:$0xf]
      %v106 = vld [vmem:[#allocation6 + $0x74] sm:$0xf]
      %v107 = vld [vmem:[#allocation6 + $0x78] sm:$0xf]
      %v108 = vld [vmem:[#allocation6 + $0x7c] sm:$0xf]
      %v109 = vld [vmem:[%s2] sm:$0x1]
      %v111 = vperm.slane %v109, 0
      %v115 = vunpack.c.l.b16 %v75
      %v116 = vunpack.c.h.b16 %v75
      %v117 = vunpack.c.l.b16 %v76
      %v118 = vunpack.c.h.b16 %v76
      %v119 = vpack.c.b16 %v117, %v115
      %v120 = vpack.c.b16 %v118, %v116
      %v155 = vunpack.c.l.b16 %v77
      %v156 = vunpack.c.l.b16 %v78
      %v157 = vunpack.c.l.b16 %v79
      %v158 = vunpack.c.l.b16 %v80
      %v159 = vunpack.c.l.b16 %v81
      %v160 = vunpack.c.l.b16 %v82
      %v161 = vunpack.c.l.b16 %v83
      %v162 = vunpack.c.l.b16 %v84
      %v163 = vunpack.c.l.b16 %v85
      %v164 = vunpack.c.l.b16 %v86
      %v165 = vunpack.c.l.b16 %v87
      %v166 = vunpack.c.l.b16 %v88
      %v167 = vunpack.c.l.b16 %v89
      %v168 = vunpack.c.l.b16 %v90
      %v169 = vunpack.c.l.b16 %v91
      %v170 = vunpack.c.l.b16 %v92
      %v171 = vunpack.c.l.b16 %v93
      %v172 = vunpack.c.l.b16 %v94
      %v173 = vunpack.c.l.b16 %v95
      %v174 = vunpack.c.l.b16 %v96
      %v175 = vunpack.c.l.b16 %v97
      %v176 = vunpack.c.l.b16 %v98
      %v177 = vunpack.c.l.b16 %v99
      %v178 = vunpack.c.l.b16 %v100
      %v179 = vunpack.c.l.b16 %v101
      %v180 = vunpack.c.l.b16 %v102
      %v181 = vunpack.c.l.b16 %v103
      %v182 = vunpack.c.l.b16 %v104
      %v183 = vunpack.c.l.b16 %v105
      %v184 = vunpack.c.l.b16 %v106
      %v185 = vunpack.c.l.b16 %v107
      %v186 = vunpack.c.l.b16 %v108
      %v187 = vpack.c.b16 %v156, %v155
      %v188 = vpack.c.b16 %v158, %v157
      %v189 = vpack.c.b16 %v160, %v159
      %v190 = vpack.c.b16 %v162, %v161
      %v191 = vpack.c.b16 %v164, %v163
      %v192 = vpack.c.b16 %v166, %v165
      %v193 = vpack.c.b16 %v168, %v167
      %v194 = vpack.c.b16 %v170, %v169
      %v195 = vpack.c.b16 %v172, %v171
      %v196 = vpack.c.b16 %v174, %v173
      %v197 = vpack.c.b16 %v176, %v175
      %v198 = vpack.c.b16 %v178, %v177
      %v199 = vpack.c.b16 %v180, %v179
      %v200 = vpack.c.b16 %v182, %v181
      %v201 = vpack.c.b16 %v184, %v183
      %v202 = vpack.c.b16 %v186, %v185
      %219 = vmatpush.bf16.msra.mxu0 %v194
      %220 = vmatpush.bf16.msra.mxu0 %v193
      %221 = vmatpush.bf16.msra.mxu0 %v192
      %222 = vmatpush.bf16.msra.mxu0 %v191
      %223 = vmatpush.bf16.msra.mxu0 %v190
      %224 = vmatpush.bf16.msra.mxu0 %v189
      %225 = vmatpush.bf16.msra.mxu0 %v188
      %226 = vmatpush.bf16.msra.mxu0 %v187
      %227 = vmatmul.bf16.gmra.mxu0 %v119
      %v228 = vpop.f32.mrf.mxu0
      %v229 = vadd.f32 %v111, %v228
      %v230 = vpop.f32.mrf.mxu0
      %v231 = vadd.f32 %v111, %v230
      %232 = vdwg.mxu0
      %233 = vmatpush.bf16.msra.mxu0 %v202
      %234 = vmatpush.bf16.msra.mxu0 %v201
      %235 = vmatpush.bf16.msra.mxu0 %v200
      %236 = vmatpush.bf16.msra.mxu0 %v199
      %237 = vmatpush.bf16.msra.mxu0 %v198
      %238 = vmatpush.bf16.msra.mxu0 %v197
      %239 = vmatpush.bf16.msra.mxu0 %v196
      %240 = vmatpush.bf16.msra.mxu0 %v195
      %241 = vmatmul.bf16.gmra.mxu0 %v120
      %v242 = vpop.f32.mrf.mxu0
      %v243 = vadd.f32 %v229, %v242
      %v244 = vpop.f32.mrf.mxu0
      %v245 = vadd.f32 %v231, %v244
      %246 = vdwg.mxu0
      %v247 = vmax.f32 %v243, 0.0
      %v248 = vmax.f32 %v245, 0.0
      %v249 = vpack.c.bf16 %v247, %v247
      %v250 = vpack.c.bf16 %v248, %v248
      %251 = vst [vmem:[#allocation2] sm:$0xf] %v249
      %252 = vst [vmem:[#allocation2 + $0x4] sm:$0xf] %v250
      %253 = vst [vmem:[#allocation10] sm:$0xf] %v249
      %254 = vst [vmem:[#allocation10 + $0x4] sm:$0xf] %v250
    $region37: #{tpu_custom_call.1} parent=1 // pred_fallthru
      _
    %v255 = vld [vmem:[#allocation2] sm:$0xf]
    %v256 = vld [vmem:[#allocation2 + $0x4] sm:$0xf]
    %v257 = vld [vmem:[#allocation8] sm:$0xf]
    %v258 = vld [vmem:[#allocation8 + $0x4] sm:$0xf]
    %v259 = vld [vmem:[#allocation8 + $0x8] sm:$0xf]
    %v260 = vld [vmem:[#allocation8 + $0xc] sm:$0xf]
    %v261 = vld [vmem:[#allocation8 + $0x10] sm:$0xf]
    %v262 = vld [vmem:[#allocation8 + $0x14] sm:$0xf]
    %v263 = vld [vmem:[#allocation8 + $0x18] sm:$0xf]
    %v264 = vld [vmem:[#allocation8 + $0x1c] sm:$0xf]
    %v265 = vld [vmem:[#allocation8 + $0x20] sm:$0xf]
    %v266 = vld [vmem:[#allocation8 + $0x24] sm:$0xf]
    %v267 = vld [vmem:[#allocation8 + $0x28] sm:$0xf]
    %v268 = vld [vmem:[#allocation8 + $0x2c] sm:$0xf]
    %v269 = vld [vmem:[#allocation8 + $0x30] sm:$0xf]
    %v270 = vld [vmem:[#allocation8 + $0x34] sm:$0xf]
    %v271 = vld [vmem:[#allocation8 + $0x38] sm:$0xf]
    %v272 = vld [vmem:[#allocation8 + $0x3c] sm:$0xf]
    %v273 = vld [vmem:[%s4] sm:$0x1]
    %v275 = vperm.slane %v273, 0
    %v279 = vunpack.c.l.b16 %v255
    %v280 = vunpack.c.l.b16 %v256
    %v281 = vpack.c.b16 %v280, %v279
    %v299 = vunpack.c.l.b16 %v257
    %v300 = vunpack.c.l.b16 %v258
    %v301 = vunpack.c.l.b16 %v259
    %v302 = vunpack.c.l.b16 %v260
    %v303 = vunpack.c.l.b16 %v261
    %v304 = vunpack.c.l.b16 %v262
    %v305 = vunpack.c.l.b16 %v263
    %v306 = vunpack.c.l.b16 %v264
    %v307 = vunpack.c.l.b16 %v265
    %v308 = vunpack.c.l.b16 %v266
    %v309 = vunpack.c.l.b16 %v267
    %v310 = vunpack.c.l.b16 %v268
    %v311 = vunpack.c.l.b16 %v269
    %v312 = vunpack.c.l.b16 %v270
    %v313 = vunpack.c.l.b16 %v271
    %v314 = vunpack.c.l.b16 %v272
    %v315 = vpack.c.b16 %v300, %v299
    %v316 = vpack.c.b16 %v302, %v301
    %v317 = vpack.c.b16 %v304, %v303
    %v318 = vpack.c.b16 %v306, %v305
    %v319 = vpack.c.b16 %v308, %v307
    %v320 = vpack.c.b16 %v310, %v309
    %v321 = vpack.c.b16 %v312, %v311
    %v322 = vpack.c.b16 %v314, %v313
    %331 = vmatpush.bf16.msra.mxu0 %v322
    %332 = vmatpush.bf16.msra.mxu0 %v321
    %333 = vmatpush.bf16.msra.mxu0 %v320
    %334 = vmatpush.bf16.msra.mxu0 %v319
    %335 = vmatpush.bf16.msra.mxu0 %v318
    %336 = vmatpush.bf16.msra.mxu0 %v317
    %337 = vmatpush.bf16.msra.mxu0 %v316
    %338 = vmatpush.bf16.msra.mxu0 %v315
    %339 = vmatmul.bf16.gmra.mxu0 %v281
    %v340 = vpop.f32.mrf.mxu0
    %v341 = vadd.f32 %v275, %v340
    %v342 = vpop.f32.mrf.mxu0
    %v343 = vadd.f32 %v275, %v342
    %344 = vdwg.mxu0
    %345 = vst [vmem:[#allocation9] sm:$0xff] %v341
    %346 = vst [vmem:[#allocation9 + $0x8] sm:$0xff] %v343
    // Predicated region
    $region38: #{tpu_custom_call.1} parent=1 // pred_check
      _
    $region39: #{tpu_custom_call.1} parent=1 // pred_check_branch
      %348 = sbr.rel (0) target = $region41
    $region40: #{tpu_custom_call.1} parent=1 // pred_region
      %350 = vsyncadd [#allocation5], 0
      %s351 = sshll.u32 [#allocation9], 4
      %s352 = int_to_ptr.vmem [resolvable:$true] %s351
      %s353 = sshll.u32 %s5, 4
      %s354 = int_to_ptr.hbm [resolvable:$true] %s353
      %359 = dma.vmem_to_hbm [thread:$0]  %s352, 256, %s354, [#allocation5], 128, 128, 8
    $region41: #{tpu_custom_call.1} parent=1 // pred_fallthru
      _
    // Predicated region
    $region42: #{tpu_custom_call.1} parent=1 // pred_check
      _
    $region43: #{tpu_custom_call.1} parent=1 // pred_check_branch
      %361 = sbr.rel (0) target = $region45
    $region44: #{tpu_custom_call.1} parent=1 // pred_region
      %363 = vsyncadd [#allocation11], 0
      %s364 = sshll.u32 [#allocation10], 4
      %s365 = int_to_ptr.vmem [resolvable:$true] %s364
      %s366 = sshll.u32 %s6, 4
      %s367 = int_to_ptr.hbm [resolvable:$true] %s366
      %372 = dma.vmem_to_hbm [thread:$0]  %s365, 128, %s367, [#allocation11], 64, 64, 4
    $region45: #{tpu_custom_call.1} parent=1 // pred_fallthru
      _
    // Predicated region
    $region46: #{tpu_custom_call.1} parent=1 // pred_check
      _
    $region47: #{tpu_custom_call.1} parent=1 // pred_check_branch
      %374 = sbr.rel (0) target = $region49
    $region48: #{tpu_custom_call.1} parent=1 // pred_region
      %376 = dma.done [#allocation5], 256
    $region49: #{tpu_custom_call.1} parent=1 // pred_fallthru
      _
    // Predicated region
    $region50: #{tpu_custom_call.1} parent=1 // pred_check
      _
    $region51: #{tpu_custom_call.1} parent=1 // pred_check_branch
      %378 = sbr.rel (0) target = $region53
    $region52: #{tpu_custom_call.1} parent=1 // pred_region
      %380 = dma.done [#allocation11], 128
    $region53: #{tpu_custom_call.1} parent=1 // pred_fallthru
      _
    %381 = vsyncpa [#allocation4], 1
    %382 = vsyncpa [#allocation7], 1
    %383 = vsyncpa [#allocation5], 1
    %384 = vsyncpa [#allocation11], 1

</llo_original>
